<compile_context>
chip_gen: v6e
topology: v6e:2x2x1
jax: 0.10.0
libtpu: 0.0.40
codegen_flags: <defaults>
</compile_context>

<pallas_src>
import functools

import jax
import jax.numpy as jnp
from jax import lax
from jax.experimental import pallas as pl
from jax.experimental.pallas import tpu as pltpu


def _siren_kernel(x_ref, w_ref, b_ref, o_ref):
    # x_ref: (bm, H_eff)      streaming input row tile
    # w_ref: (H_eff, H_eff)   w0-scaled (block-diag) weight, [out, in] layout
    # b_ref: (1, H_eff)       w0-scaled (tiled) bias row
    # o_ref: (bm, H_eff)      output row tile
    z = lax.dot_general(
        x_ref[...], w_ref[...],
        dimension_numbers=(((1,), (1,)), ((), ())),   # == x @ W.T on the MXU
        precision=lax.Precision.HIGHEST,              # match f32 reference
        preferred_element_type=jnp.float32,
    )
    o_ref[...] = jnp.sin(z + b_ref[...]).astype(o_ref.dtype)


def _round_up(n, m):
    return ((n + m - 1) // m) * m


def _vmem_budget_bytes():
    """~80% of this generation's per-core VMEM (headroom for Mosaic scratch)."""
    cap = None
    try:
        cap = getattr(pltpu.get_tpu_info(), "vmem_capacity_bytes", None)
    except Exception:
        cap = None
    if not cap or cap <= 0:
        cap = 64 << 20  # conservative fallback = v7x per-TensorCore VMEM
    return (int(cap) * 4) // 5


@functools.partial(jax.jit, static_argnames=("block_rows",))
def siren_mlp(x, weight, bias, w0=1.0, block_rows=512):
    """x: [..., H]; weight: [H, H] (PyTorch layout, out x in); bias: [H]."""
    orig_shape = x.shape
    H = orig_shape[-1]
    x2d = x.reshape(-1, H)
    N = x2d.shape[0]

    # Fold w0 into the parameters (one-time HxH rescale, not an input-sized op).
    w0 = jnp.asarray(w0, jnp.float32)
    w_scaled = weight.astype(jnp.float32) * w0
    b_scaled = bias.astype(jnp.float32) * w0

    # ---- Lane-dense packing for small H -------------------------------------
    pack = 128 // H if (H < 128 and 128 % H == 0) else 1
    if pack > 1:
        n_pad = _round_up(N, pack)
        if n_pad != N:
            # Pad rows so pack logical rows fill each 128-lane physical row;
            # padded rows are sliced off after the kernel.
            x2d = jnp.pad(x2d, ((0, n_pad - N), (0, 0)))
        x_in = x2d.reshape(n_pad // pack, H * pack)                    # free
        w_in = jnp.kron(jnp.eye(pack, dtype=jnp.float32), w_scaled)   # blockdiag
        b_in = jnp.tile(b_scaled, pack).reshape(1, H * pack)
    else:
        n_pad = N
        x_in = x2d
        w_in = w_scaled
        b_in = b_scaled.reshape(1, H)

    n_eff, h_eff = x_in.shape
    itemsize = 4  # f32 throughout (bf16 I/O is a further ~2x if tolerance allows)

    # ---- Row tile ------------------------------------------------------------
    # Big tiles amortize the ~0.35us/step pipeline overhead, but (a) keep >= 4
    # grid steps so both v7x TensorCores get >= 2 overlapped steps, and (b) keep
    # the resident weight plus 4 double-buffered row tiles inside the budget.
    vmem_budget = _vmem_budget_bytes()
    bytes_weight = (h_eff * h_eff + 2 * h_eff) * itemsize
    bytes_per_row = 4 * h_eff * itemsize                 # 2x in + 2x out buffers
    avail = max(vmem_budget - bytes_weight - (4 << 20), bytes_per_row * 8)
    bm_cap = max(8, (avail // bytes_per_row) // 8 * 8)
    # TODO(synk): for H*H*4 approaching the VMEM budget (H >= ~2-4K), tile the
    # weight over output features with a second "parallel" grid axis instead of
    # collapsing bm.

    bm = min(block_rows, _round_up(pl.cdiv(n_eff, 4), 8), bm_cap)
    bm = max(bm, 8)
    grid_m = pl.cdiv(n_eff, bm)
    if grid_m >= 4 and grid_m % 2 == 1:
        # Prefer an even step count so both v7x TensorCores do equal work.
        bm_alt = max(8, _round_up(pl.cdiv(n_eff, grid_m + 1), 8))
        if bm_alt <= bm_cap:
            bm = bm_alt
            grid_m = pl.cdiv(n_eff, bm)

    vmem_need = bytes_weight + bytes_per_row * bm
    vmem_limit = int(min(max(vmem_need + (8 << 20), 32 << 20), vmem_budget))

    out = pl.pallas_call(
        _siren_kernel,
        out_shape=jax.ShapeDtypeStruct((n_eff, h_eff), x.dtype),
        grid=(grid_m,),
        in_specs=[
            pl.BlockSpec((bm, h_eff), lambda i: (i, 0)),        # streaming rows
            pl.BlockSpec((h_eff, h_eff), lambda i: (0, 0)),     # resident weight
            pl.BlockSpec((1, h_eff), lambda i: (0, 0)),         # resident bias
        ],
        out_specs=pl.BlockSpec((bm, h_eff), lambda i: (i, 0)),
        compiler_params=pltpu.CompilerParams(
            dimension_semantics=("parallel",),
            vmem_limit_bytes=vmem_limit,
        ),
    )(x_in, w_in, b_in)

    if pack > 1:
        out = out.reshape(n_pad, H)[:N]
    return out.reshape(orig_shape)


def _reference(x, weight, bias, w0):
    z = jnp.einsum("...i,oi->...o", x, weight,
                   precision=jax.lax.Precision.HIGHEST)
    return jnp.sin(w0 * (z + bias))


if __name__ == "__main__":
    hidden_dim = 32
    batch, seq = 2, 8
    w0 = 2.0

    key = jax.random.PRNGKey(0)
    kx, kw, kb = jax.random.split(key, 3)

    # Deterministic parameter init (matches nn.Linear shapes: W [H,H], b [H]).
    bound = 1.0 / jnp.sqrt(hidden_dim)
    weight = jax.random.uniform(kw, (hidden_dim, hidden_dim),
                                minval=-bound, maxval=bound, dtype=jnp.float32)
    bias = jax.random.uniform(kb, (hidden_dim,),
                              minval=-bound, maxval=bound, dtype=jnp.float32)

    x = jax.random.normal(kx, (batch, seq, hidden_dim), dtype=jnp.float32)

    out = siren_mlp(x, weight, bias, w0)
    out = jax.block_until_ready(out)

    ref = _reference(x, weight, bias, w0)
    assert out.shape == x.shape
    assert jnp.allclose(out, ref, atol=1e-4, rtol=1e-5), \
        float(jnp.max(jnp.abs(out - ref)))

    print("KERNEL_OK")
</pallas_src>

<mosaic_0001>
module attributes {stable_mosaic.version = 11 : i64} {
  func.func @_siren_kernel(%arg0: i32, %arg1: memref<8x128xf32, #tpu.memory_space<vmem>>, %arg2: memref<128x128xf32, #tpu.memory_space<vmem>>, %arg3: memref<1x128xf32, #tpu.memory_space<vmem>>, %arg4: memref<8x128xf32, #tpu.memory_space<vmem>>) attributes {dimension_semantics = [#tpu.dimension_semantics<parallel>], iteration_bounds = array<i64: 1>, scalar_prefetch = 0 : i64, scratch_operands = 0 : i64, tpu.core_type = #tpu.core_type<tc>, window_params = [{transform_indices = @transform_0, window_bounds = array<i64: 8, 128>}, {pipeline_mode = #tpu.pipeline_mode<synchronous>, transform_indices = @transform_1, window_bounds = array<i64: 128, 128>}, {pipeline_mode = #tpu.pipeline_mode<synchronous>, transform_indices = @transform_2, window_bounds = array<i64: 1, 128>}, {transform_indices = @transform_3, window_bounds = array<i64: 8, 128>}]} {
    %c0 = arith.constant 0 : index
    %c0_0 = arith.constant 0 : index
    %0 = vector.load %arg1[%c0, %c0_0] : memref<8x128xf32, #tpu.memory_space<vmem>>, vector<8x128xf32>
    %c0_1 = arith.constant 0 : index
    %c0_2 = arith.constant 0 : index
    %1 = vector.load %arg2[%c0_1, %c0_2] : memref<128x128xf32, #tpu.memory_space<vmem>>, vector<128x128xf32>
    %cst = arith.constant dense<0.000000e+00> : vector<8x128xf32>
    %2 = tpu.matmul %0, %1, %cst {dimension_numbers = #tpu.dot_dimension_numbers<[1], [1], [0], [0], [0, 0, 1, 0], [], []>, precision = #tpu.contract_precision<fp32>} : vector<8x128xf32>, vector<128x128xf32>, vector<8x128xf32> -> vector<8x128xf32>
    %c0_3 = arith.constant 0 : index
    %c0_4 = arith.constant 0 : index
    %3 = vector.load %arg3[%c0_3, %c0_4] : memref<1x128xf32, #tpu.memory_space<vmem>>, vector<1x128xf32>
    %4 = vector.broadcast %3 : vector<1x128xf32> to vector<8x128xf32>
    %5 = arith.addf %2, %4 : vector<8x128xf32>
    %6 = math.sin %5 : vector<8x128xf32>
    %c0_5 = arith.constant 0 : index
    %c0_6 = arith.constant 0 : index
    %7 = vector.load %arg4[%c0_5, %c0_6] : memref<8x128xf32, #tpu.memory_space<vmem>>, vector<8x128xf32>
    tpu.vector_store %arg4[%c0_5, %c0_6], %6 {strides = array<i32>} : memref<8x128xf32, #tpu.memory_space<vmem>>, vector<8x128xf32>,
    return
  }
  func.func @transform_0(%arg0: i32) -> (i32, i32) {
    %c0_i32 = arith.constant 0 : i32
    %c0_i32_0 = arith.constant 0 : i32
    return %arg0, %c0_i32 : i32, i32
  }
  func.func @transform_1(%arg0: i32) -> (i32, i32) {
    %c0_i32 = arith.constant 0 : i32
    %c0_i32_0 = arith.constant 0 : i32
    %c0_i32_1 = arith.constant 0 : i32
    return %c0_i32, %c0_i32_0 : i32, i32
  }
  func.func @transform_2(%arg0: i32) -> (i32, i32) {
    %c0_i32 = arith.constant 0 : i32
    %c0_i32_0 = arith.constant 0 : i32
    %c0_i32_1 = arith.constant 0 : i32
    return %c0_i32, %c0_i32_0 : i32, i32
  }
  func.func @transform_3(%arg0: i32) -> (i32, i32) {
    %c0_i32 = arith.constant 0 : i32
    %c0_i32_0 = arith.constant 0 : i32
    return %arg0, %c0_i32 : i32, i32
  }
}

</mosaic_0001>

<llo_original>
// kernel: tile.9
$region0: #{tile.9}
  %s0 = inlined_call_operand.vmem [shape: f32[4,32], index: 0, kind: input, shape index: {}]
  %s1 = inlined_call_operand.vmem [shape: f32[1,128], index: 1, kind: output, shape index: {}]
  $region1: #{tile.9} parent=0
    #allocation0 [shape = 'u8[4096]{0}', space=vmem, size = 0x1000, scoped, tag = 'scoped mem for output reshape']
    #allocation1 [shape = 'u8[4096]{0}', space=vmem, size = 0x1000, scoped, tag = 'scoped mem for input reshape']
    %s3 = sshll.u32 1, 4
    %s4 = ssub.s32 %s3, 1
    %v5 = vld [vmem:[%s0] sm:%s4]
    %6 = vst [vmem:[#allocation1] sm:%s4] %v5
    %v7 = vld [vmem:[#allocation1] sm:$0x1]
    %vm8 = vcmask 261120
    %9 = vst.msk [vmem:[#allocation0] sm:$0x1] %vm8, %v7
    %s10 = scalar_lea.vmem [#allocation1], 3
    %v11 = vld [vmem:[%s10] sm:$0x1]
    %12 = vrot.lane.b32.xlu0 %v11, 96
    %v13 = vpop.permute.xlu0 %12
    %vm14 = vcmask 1048320
    %15 = vst.msk [vmem:[#allocation0] sm:$0x1] %vm14, %v13
    %s16 = scalar_lea.vmem [#allocation1], 2
    %v17 = vld [vmem:[%s16] sm:$0x1]
    %18 = vrot.lane.b32.xlu0 %v17, 64
    %v19 = vpop.permute.xlu0 %18
    %vm20 = vcmask 785920
    %21 = vst.msk [vmem:[#allocation0] sm:$0x1] %vm20, %v19
    %s22 = scalar_lea.vmem [#allocation1], 1
    %v23 = vld [vmem:[%s22] sm:$0x1]
    %24 = vrot.lane.b32.xlu0 %v23, 32
    %v25 = vpop.permute.xlu0 %24
    %vm26 = vcmask 523520
    %27 = vst.msk [vmem:[#allocation0] sm:$0x1] %vm26, %v25
    %s29 = sshll.u32 1, 1
    %s30 = ssub.s32 %s29, 1
    %v32 = vld [vmem:[#allocation0] sm:%s30]
    %s33 = sshll.u32 1, 1
    %s34 = ssub.s32 %s33, 1
    %35 = vst [vmem:[%s1] sm:%s34] %v32

// kernel: tile.8
$region0: #{tile.8}
  #allocation0 [shape = 's32[1]{0}', space=sflag, size = 0x4, scoped, tag = 'scoped memory for tile.8']
  %s0 = inlined_call_operand.vmem [shape: f32[32], index: 0, kind: input, shape index: {}]
  %s1 = inlined_call_operand.vmem [shape: f32[4,32], index: 1, kind: output, shape index: {}]
  // Predicated region
  $region2: #{tile.8} parent=0 // pred_check
    _
  $region3: #{tile.8} parent=0 // pred_check_branch
    %3 = sbr.rel (0) target = $region5
  $region4: #{tile.8} parent=0 // pred_region
    _
  $region5: #{tile.8} parent=0 // pred_fallthru
    _
  %v4 = vld [vmem:[%s0] ss:$0 sm:$0xff]
  %5 = vst [vmem:[%s1] sm:$0xf] %v4

// kernel: siren_mlp.1
$region0: #{siren_mlp.1}
  #allocation0 [shape = 'u32[]', space=smem, size = 0x4, offset = 0x4, fixed_abs, tag = 'smem constant byte address 0x4 - core index']
  #allocation1 [shape = 'u32[144,128]{1,0:T(1,128)}', space=vmem, size = 0x12000, scoped, tag = 'internal scratch']
  %s0 = inlined_call_operand.vmem [shape: f32[4,128], index: 0, kind: input, shape index: {}]
  %s1 = inlined_call_operand.vmem [shape: f32[128,128], index: 1, kind: input, shape index: {}]
  %s2 = inlined_call_operand.vmem [shape: f32[1,128], index: 2, kind: input, shape index: {}]
  %s3 = inlined_call_operand.vmem [shape: f32[4,128], index: 3, kind: output, shape index: {}]
  %s4 = sld [smem:[#allocation0]]
  $region52: #{siren_mlp.1} parent=0
    _
  %s6 = ssub.s32 1, %s4
  %s7 = scalar_select 0, %s6, %s4
  $region1: #{siren_mlp.1} parent=0
    #allocation2 [shape = 'u8[4096]{0}', space=vmem, size = 0x1000, scoped, tag = 'output window, operand 0, single buffered']
    // Predicated region
    $region2: #{siren_mlp.1} parent=1 // pred_check
      _
    $region3: #{siren_mlp.1} parent=1 // pred_check_branch
      %9 = sbr.rel (0) target = $region5
    $region4: #{siren_mlp.1} parent=1 // pred_region
      _
    $region5: #{siren_mlp.1} parent=1 // pred_fallthru
      _
    // Predicated region
    $region6: #{siren_mlp.1} parent=1 // pred_check
      _
    $region7: #{siren_mlp.1} parent=1 // pred_check_branch
      %11 = sbr.rel (0) target = $region9
    $region8: #{siren_mlp.1} parent=1 // pred_region
      _
    $region9: #{siren_mlp.1} parent=1 // pred_fallthru
      _
    // Predicated region
    $region10: #{siren_mlp.1} parent=1 // pred_check
      _
    $region11: #{siren_mlp.1} parent=1 // pred_check_branch
      %13 = sbr.rel (0) target = $region13
    $region12: #{siren_mlp.1} parent=1 // pred_region
      _
    $region13: #{siren_mlp.1} parent=1 // pred_fallthru
      _
    %v14 = vld [vmem:[%s0] sm:$0xff]
    %v15 = vld [vmem:[%s1] sm:$0xff]
    %v16 = vld [vmem:[%s1 + $0x8] sm:$0xff]
    %v17 = vld [vmem:[%s1 + $0x10] sm:$0xff]
    %v18 = vld [vmem:[%s1 + $0x18] sm:$0xff]
    %v19 = vld [vmem:[%s1 + $0x20] sm:$0xff]
    %v20 = vld [vmem:[%s1 + $0x28] sm:$0xff]
    %v21 = vld [vmem:[%s1 + $0x30] sm:$0xff]
    %v22 = vld [vmem:[%s1 + $0x38] sm:$0xff]
    %v23 = vld [vmem:[%s1 + $0x40] sm:$0xff]
    %v24 = vld [vmem:[%s1 + $0x48] sm:$0xff]
    %v25 = vld [vmem:[%s1 + $0x50] sm:$0xff]
    %v26 = vld [vmem:[%s1 + $0x58] sm:$0xff]
    %v27 = vld [vmem:[%s1 + $0x60] sm:$0xff]
    %v28 = vld [vmem:[%s1 + $0x68] sm:$0xff]
    %v29 = vld [vmem:[%s1 + $0x70] sm:$0xff]
    %v30 = vld [vmem:[%s1 + $0x78] sm:$0xff]
    %v31 = vld [vmem:[%s2] sm:$0x1]
    %v33 = vlaneseq
    %v34 = vshrl.u32 %v33, 7
    %v35 = vsub.s32 0, %v34
    %v36 = vrot.slane %v31, %v35
    %38 = vmatprep.subr.mxu0 0.0
    %v39 = vand.u32 %v30, 4294901760
    %40 = vmatpush1.xpose.msra.mxu0 %v39
    %41 = vmatprep.subr.mxu0 0.0
    %v42 = vand.u32 %v29, 4294901760
    %43 = vmatpush1.xpose.msra.mxu0 %v42
    %44 = vmatprep.subr.mxu0 0.0
    %v45 = vand.u32 %v28, 4294901760
    %46 = vmatpush1.xpose.msra.mxu0 %v45
    %47 = vmatprep.subr.mxu0 0.0
    %v48 = vand.u32 %v27, 4294901760
    %49 = vmatpush1.xpose.msra.mxu0 %v48
    %50 = vmatprep.subr.mxu0 0.0
    %v51 = vand.u32 %v26, 4294901760
    %52 = vmatpush1.xpose.msra.mxu0 %v51
    %53 = vmatprep.subr.mxu0 0.0
    %v54 = vand.u32 %v25, 4294901760
    %55 = vmatpush1.xpose.msra.mxu0 %v54
    %56 = vmatprep.subr.mxu0 0.0
    %v57 = vand.u32 %v24, 4294901760
    %58 = vmatpush1.xpose.msra.mxu0 %v57
    %59 = vmatprep.subr.mxu0 0.0
    %v60 = vand.u32 %v23, 4294901760
    %61 = vmatpush1.xpose.msra.mxu0 %v60
    %62 = vmatprep.subr.mxu0 0.0
    %v63 = vand.u32 %v22, 4294901760
    %64 = vmatpush1.xpose.msra.mxu0 %v63
    %65 = vmatprep.subr.mxu0 0.0
    %v66 = vand.u32 %v21, 4294901760
    %67 = vmatpush1.xpose.msra.mxu0 %v66
    %68 = vmatprep.subr.mxu0 0.0
    %v69 = vand.u32 %v20, 4294901760
    %70 = vmatpush1.xpose.msra.mxu0 %v69
    %71 = vmatprep.subr.mxu0 0.0
    %v72 = vand.u32 %v19, 4294901760
    %73 = vmatpush1.xpose.msra.mxu0 %v72
    %74 = vmatprep.subr.mxu0 0.0
    %v75 = vand.u32 %v18, 4294901760
    %76 = vmatpush1.xpose.msra.mxu0 %v75
    %77 = vmatprep.subr.mxu0 0.0
    %v78 = vand.u32 %v17, 4294901760
    %79 = vmatpush1.xpose.msra.mxu0 %v78
    %80 = vmatprep.subr.mxu0 0.0
    %v81 = vand.u32 %v16, 4294901760
    %82 = vmatpush1.xpose.msra.mxu0 %v81
    %83 = vmatprep.subr.mxu0 0.0
    %v84 = vand.u32 %v15, 4294901760
    %85 = vmatpush1.xpose.msra.mxu0 %v84
    %86 = vmatprep.subr.mxu0 0.0
    %87 = vmatpush2.xpose.msra.mxu0 0.0
    %88 = vmatprep.subr.mxu0 0.0
    %89 = vmatpush2.xpose.msra.mxu0 0.0
    %90 = vmatprep.subr.mxu0 0.0
    %91 = vmatpush2.xpose.msra.mxu0 0.0
    %92 = vmatprep.subr.mxu0 0.0
    %93 = vmatpush2.xpose.msra.mxu0 0.0
    %94 = vmatprep.subr.mxu0 0.0
    %95 = vmatpush2.xpose.msra.mxu0 0.0
    %96 = vmatprep.subr.mxu0 0.0
    %97 = vmatpush2.xpose.msra.mxu0 0.0
    %98 = vmatprep.subr.mxu0 0.0
    %99 = vmatpush2.xpose.msra.mxu0 0.0
    %100 = vmatprep.subr.mxu0 0.0
    %101 = vmatpush2.xpose.msra.mxu0 0.0
    %102 = vmatprep.subr.mxu0 0.0
    %103 = vmatpush2.xpose.msra.mxu0 0.0
    %104 = vmatprep.subr.mxu0 0.0
    %105 = vmatpush2.xpose.msra.mxu0 0.0
    %106 = vmatprep.subr.mxu0 0.0
    %107 = vmatpush2.xpose.msra.mxu0 0.0
    %108 = vmatprep.subr.mxu0 0.0
    %109 = vmatpush2.xpose.msra.mxu0 0.0
    %110 = vmatprep.subr.mxu0 0.0
    %111 = vmatpush2.xpose.msra.mxu0 0.0
    %112 = vmatprep.subr.mxu0 0.0
    %113 = vmatpush2.xpose.msra.mxu0 0.0
    %114 = vmatprep.subr.mxu0 0.0
    %115 = vmatpush2.xpose.msra.mxu0 0.0
    %116 = vmatprep.subr.mxu0 0.0
    %117 = vmatpush2.xpose.msra.mxu0 0.0
    %118 = vmatprep.mubr.f32.mxu0 0.0
    %v119 = vand.u32 %v14, 4294901760
    %v120 = vsub.f32 %v14, %v119
    %v121 = vand.u32 %v120, 4294901760
    %v122 = vsub.f32 %v120, %v121
    %v123 = vand.u32 %v122, 4294901760
    %124 = vmatmul.mubr.f32.gmra.mxu0 %v123
    %v125 = vpop.f32.mrf.mxu0
    %v126 = vadd.f32 %v36, %v125
    %v127 = vpop.f32.mrf.mxu0
    %128 = vdwg.mxu0
    %129 = vmatprep.subr.mxu0 0.0
    %v130 = vand.u32 %v30, 4294901760
    %v131 = vsub.f32 %v30, %v130
    %v132 = vand.u32 %v131, 4294901760
    %v133 = vsub.f32 %v131, %v132
    %v134 = vand.u32 %v133, 4294901760
    %135 = vmatpush1.xpose.msra.mxu0 %v134
    %136 = vmatprep.subr.mxu0 0.0
    %v137 = vand.u32 %v29, 4294901760
    %v138 = vsub.f32 %v29, %v137
    %v139 = vand.u32 %v138, 4294901760
    %v140 = vsub.f32 %v138, %v139
    %v141 = vand.u32 %v140, 4294901760
    %142 = vmatpush1.xpose.msra.mxu0 %v141
    %143 = vmatprep.subr.mxu0 0.0
    %v144 = vand.u32 %v28, 4294901760
    %v145 = vsub.f32 %v28, %v144
    %v146 = vand.u32 %v145, 4294901760
    %v147 = vsub.f32 %v145, %v146
    %v148 = vand.u32 %v147, 4294901760
    %149 = vmatpush1.xpose.msra.mxu0 %v148
    %150 = vmatprep.subr.mxu0 0.0
    %v151 = vand.u32 %v27, 4294901760
    %v152 = vsub.f32 %v27, %v151
    %v153 = vand.u32 %v152, 4294901760
    %v154 = vsub.f32 %v152, %v153
    %v155 = vand.u32 %v154, 4294901760
    %156 = vmatpush1.xpose.msra.mxu0 %v155
    %157 = vmatprep.subr.mxu0 0.0
    %v158 = vand.u32 %v26, 4294901760
    %v159 = vsub.f32 %v26, %v158
    %v160 = vand.u32 %v159, 4294901760
    %v161 = vsub.f32 %v159, %v160
    %v162 = vand.u32 %v161, 4294901760
    %163 = vmatpush1.xpose.msra.mxu0 %v162
    %164 = vmatprep.subr.mxu0 0.0
    %v165 = vand.u32 %v25, 4294901760
    %v166 = vsub.f32 %v25, %v165
    %v167 = vand.u32 %v166, 4294901760
    %v168 = vsub.f32 %v166, %v167
    %v169 = vand.u32 %v168, 4294901760
    %170 = vmatpush1.xpose.msra.mxu0 %v169
    %171 = vmatprep.subr.mxu0 0.0
    %v172 = vand.u32 %v24, 4294901760
    %v173 = vsub.f32 %v24, %v172
    %v174 = vand.u32 %v173, 4294901760
    %v175 = vsub.f32 %v173, %v174
    %v176 = vand.u32 %v175, 4294901760
    %177 = vmatpush1.xpose.msra.mxu0 %v176
    %178 = vmatprep.subr.mxu0 0.0
    %v179 = vand.u32 %v23, 4294901760
    %v180 = vsub.f32 %v23, %v179
    %v181 = vand.u32 %v180, 4294901760
    %v182 = vsub.f32 %v180, %v181
    %v183 = vand.u32 %v182, 4294901760
    %184 = vmatpush1.xpose.msra.mxu0 %v183
    %185 = vmatprep.subr.mxu0 0.0
    %v186 = vand.u32 %v22, 4294901760
    %v187 = vsub.f32 %v22, %v186
    %v188 = vand.u32 %v187, 4294901760
    %v189 = vsub.f32 %v187, %v188
    %v190 = vand.u32 %v189, 4294901760
    %191 = vmatpush1.xpose.msra.mxu0 %v190
    %192 = vmatprep.subr.mxu0 0.0
    %v193 = vand.u32 %v21, 4294901760
    %v194 = vsub.f32 %v21, %v193
    %v195 = vand.u32 %v194, 4294901760
    %v196 = vsub.f32 %v194, %v195
    %v197 = vand.u32 %v196, 4294901760
    %198 = vmatpush1.xpose.msra.mxu0 %v197
    %199 = vmatprep.subr.mxu0 0.0
    %v200 = vand.u32 %v20, 4294901760
    %v201 = vsub.f32 %v20, %v200
    %v202 = vand.u32 %v201, 4294901760
    %v203 = vsub.f32 %v201, %v202
    %v204 = vand.u32 %v203, 4294901760
    %205 = vmatpush1.xpose.msra.mxu0 %v204
    %206 = vmatprep.subr.mxu0 0.0
    %v207 = vand.u32 %v19, 4294901760
    %v208 = vsub.f32 %v19, %v207
    %v209 = vand.u32 %v208, 4294901760
    %v210 = vsub.f32 %v208, %v209
    %v211 = vand.u32 %v210, 4294901760
    %212 = vmatpush1.xpose.msra.mxu0 %v211
    %213 = vmatprep.subr.mxu0 0.0
    %v214 = vand.u32 %v18, 4294901760
    %v215 = vsub.f32 %v18, %v214
    %v216 = vand.u32 %v215, 4294901760
    %v217 = vsub.f32 %v215, %v216
    %v218 = vand.u32 %v217, 4294901760
    %219 = vmatpush1.xpose.msra.mxu0 %v218
    %220 = vmatprep.subr.mxu0 0.0
    %v221 = vand.u32 %v17, 4294901760
    %v222 = vsub.f32 %v17, %v221
    %v223 = vand.u32 %v222, 4294901760
    %v224 = vsub.f32 %v222, %v223
    %v225 = vand.u32 %v224, 4294901760
    %226 = vmatpush1.xpose.msra.mxu0 %v225
    %227 = vmatprep.subr.mxu0 0.0
    %v228 = vand.u32 %v16, 4294901760
    %v229 = vsub.f32 %v16, %v228
    %v230 = vand.u32 %v229, 4294901760
    %v231 = vsub.f32 %v229, %v230
    %v232 = vand.u32 %v231, 4294901760
    %233 = vmatpush1.xpose.msra.mxu0 %v232
    %234 = vmatprep.subr.mxu0 0.0
    %v235 = vand.u32 %v15, 4294901760
    %v236 = vsub.f32 %v15, %v235
    %v237 = vand.u32 %v236, 4294901760
    %v238 = vsub.f32 %v236, %v237
    %v239 = vand.u32 %v238, 4294901760
    %240 = vmatpush1.xpose.msra.mxu0 %v239
    %241 = vmatprep.subr.mxu0 0.0
    %242 = vmatpush2.xpose.msra.mxu0 0.0
    %243 = vmatprep.subr.mxu0 0.0
    %244 = vmatpush2.xpose.msra.mxu0 0.0
    %245 = vmatprep.subr.mxu0 0.0
    %246 = vmatpush2.xpose.msra.mxu0 0.0
    %247 = vmatprep.subr.mxu0 0.0
    %248 = vmatpush2.xpose.msra.mxu0 0.0
    %249 = vmatprep.subr.mxu0 0.0
    %250 = vmatpush2.xpose.msra.mxu0 0.0
    %251 = vmatprep.subr.mxu0 0.0
    %252 = vmatpush2.xpose.msra.mxu0 0.0
    %253 = vmatprep.subr.mxu0 0.0
    %254 = vmatpush2.xpose.msra.mxu0 0.0
    %255 = vmatprep.subr.mxu0 0.0
    %256 = vmatpush2.xpose.msra.mxu0 0.0
    %257 = vmatprep.subr.mxu0 0.0
    %258 = vmatpush2.xpose.msra.mxu0 0.0
    %259 = vmatprep.subr.mxu0 0.0
    %260 = vmatpush2.xpose.msra.mxu0 0.0
    %261 = vmatprep.subr.mxu0 0.0
    %262 = vmatpush2.xpose.msra.mxu0 0.0
    %263 = vmatprep.subr.mxu0 0.0
    %264 = vmatpush2.xpose.msra.mxu0 0.0
    %265 = vmatprep.subr.mxu0 0.0
    %266 = vmatpush2.xpose.msra.mxu0 0.0
    %267 = vmatprep.subr.mxu0 0.0
    %268 = vmatpush2.xpose.msra.mxu0 0.0
    %269 = vmatprep.subr.mxu0 0.0
    %270 = vmatpush2.xpose.msra.mxu0 0.0
    %271 = vmatprep.subr.mxu0 0.0
    %272 = vmatpush2.xpose.msra.mxu0 0.0
    %273 = vmatprep.mubr.f32.mxu0 0.0
    %v274 = vand.u32 %v14, 4294901760
    %275 = vmatmul.mubr.f32.gmra.mxu0 %v274
    %v276 = vpop.f32.mrf.mxu0
    %v277 = vadd.f32 %v126, %v276
    %v278 = vpop.f32.mrf.mxu0
    %279 = vdwg.mxu0
    %280 = vmatprep.subr.mxu0 0.0
    %v281 = vand.u32 %v30, 4294901760
    %v282 = vsub.f32 %v30, %v281
    %283 = vmatpush1.xpose.msra.mxu0 %v282
    %284 = vmatprep.subr.mxu0 0.0
    %v285 = vand.u32 %v29, 4294901760
    %v286 = vsub.f32 %v29, %v285
    %287 = vmatpush1.xpose.msra.mxu0 %v286
    %288 = vmatprep.subr.mxu0 0.0
    %v289 = vand.u32 %v28, 4294901760
    %v290 = vsub.f32 %v28, %v289
    %291 = vmatpush1.xpose.msra.mxu0 %v290
    %292 = vmatprep.subr.mxu0 0.0
    %v293 = vand.u32 %v27, 4294901760
    %v294 = vsub.f32 %v27, %v293
    %295 = vmatpush1.xpose.msra.mxu0 %v294
    %296 = vmatprep.subr.mxu0 0.0
    %v297 = vand.u32 %v26, 4294901760
    %v298 = vsub.f32 %v26, %v297
    %299 = vmatpush1.xpose.msra.mxu0 %v298
    %300 = vmatprep.subr.mxu0 0.0
    %v301 = vand.u32 %v25, 4294901760
    %v302 = vsub.f32 %v25, %v301
    %303 = vmatpush1.xpose.msra.mxu0 %v302
    %304 = vmatprep.subr.mxu0 0.0
    %v305 = vand.u32 %v24, 4294901760
    %v306 = vsub.f32 %v24, %v305
    %307 = vmatpush1.xpose.msra.mxu0 %v306
    %308 = vmatprep.subr.mxu0 0.0
    %v309 = vand.u32 %v23, 4294901760
    %v310 = vsub.f32 %v23, %v309
    %311 = vmatpush1.xpose.msra.mxu0 %v310
    %312 = vmatprep.subr.mxu0 0.0
    %v313 = vand.u32 %v22, 4294901760
    %v314 = vsub.f32 %v22, %v313
    %315 = vmatpush1.xpose.msra.mxu0 %v314
    %316 = vmatprep.subr.mxu0 0.0
    %v317 = vand.u32 %v21, 4294901760
    %v318 = vsub.f32 %v21, %v317
    %319 = vmatpush1.xpose.msra.mxu0 %v318
    %320 = vmatprep.subr.mxu0 0.0
    %v321 = vand.u32 %v20, 4294901760
    %v322 = vsub.f32 %v20, %v321
    %323 = vmatpush1.xpose.msra.mxu0 %v322
    %324 = vmatprep.subr.mxu0 0.0
    %v325 = vand.u32 %v19, 4294901760
    %v326 = vsub.f32 %v19, %v325
    %327 = vmatpush1.xpose.msra.mxu0 %v326
    %328 = vmatprep.subr.mxu0 0.0
    %v329 = vand.u32 %v18, 4294901760
    %v330 = vsub.f32 %v18, %v329
    %331 = vmatpush1.xpose.msra.mxu0 %v330
    %332 = vmatprep.subr.mxu0 0.0
    %v333 = vand.u32 %v17, 4294901760
    %v334 = vsub.f32 %v17, %v333
    %335 = vmatpush1.xpose.msra.mxu0 %v334
    %336 = vmatprep.subr.mxu0 0.0
    %v337 = vand.u32 %v16, 4294901760
    %v338 = vsub.f32 %v16, %v337
    %339 = vmatpush1.xpose.msra.mxu0 %v338
    %340 = vmatprep.subr.mxu0 0.0
    %v341 = vand.u32 %v15, 4294901760
    %v342 = vsub.f32 %v15, %v341
    %343 = vmatpush1.xpose.msra.mxu0 %v342
    %344 = vmatprep.subr.mxu0 0.0
    %345 = vmatpush2.xpose.msra.mxu0 0.0
    %346 = vmatprep.subr.mxu0 0.0
    %347 = vmatpush2.xpose.msra.mxu0 0.0
    %348 = vmatprep.subr.mxu0 0.0
    %349 = vmatpush2.xpose.msra.mxu0 0.0
    %350 = vmatprep.subr.mxu0 0.0
    %351 = vmatpush2.xpose.msra.mxu0 0.0
    %352 = vmatprep.subr.mxu0 0.0
    %353 = vmatpush2.xpose.msra.mxu0 0.0
    %354 = vmatprep.subr.mxu0 0.0
    %355 = vmatpush2.xpose.msra.mxu0 0.0
    %356 = vmatprep.subr.mxu0 0.0
    %357 = vmatpush2.xpose.msra.mxu0 0.0
    %358 = vmatprep.subr.mxu0 0.0
    %359 = vmatpush2.xpose.msra.mxu0 0.0
    %360 = vmatprep.subr.mxu0 0.0
    %361 = vmatpush2.xpose.msra.mxu0 0.0
    %362 = vmatprep.subr.mxu0 0.0
    %363 = vmatpush2.xpose.msra.mxu0 0.0
    %364 = vmatprep.subr.mxu0 0.0
    %365 = vmatpush2.xpose.msra.mxu0 0.0
    %366 = vmatprep.subr.mxu0 0.0
    %367 = vmatpush2.xpose.msra.mxu0 0.0
    %368 = vmatprep.subr.mxu0 0.0
    %369 = vmatpush2.xpose.msra.mxu0 0.0
    %370 = vmatprep.subr.mxu0 0.0
    %371 = vmatpush2.xpose.msra.mxu0 0.0
    %372 = vmatprep.subr.mxu0 0.0
    %373 = vmatpush2.xpose.msra.mxu0 0.0
    %374 = vmatprep.subr.mxu0 0.0
    %375 = vmatpush2.xpose.msra.mxu0 0.0
    %376 = vmatprep.mubr.f32.mxu0 0.0
    %v377 = vand.u32 %v14, 4294901760
    %v378 = vsub.f32 %v14, %v377
    %379 = vmatmul.mubr.f32.gmra.mxu0 %v378
    %v380 = vpop.f32.mrf.mxu0
    %v381 = vadd.f32 %v277, %v380
    %v382 = vpop.f32.mrf.mxu0
    %383 = vdwg.mxu0
    %384 = vmatprep.subr.mxu0 0.0
    %v385 = vand.u32 %v30, 4294901760
    %386 = vmatpush1.xpose.msra.mxu0 %v385
    %387 = vmatprep.subr.mxu0 0.0
    %v388 = vand.u32 %v29, 4294901760
    %389 = vmatpush1.xpose.msra.mxu0 %v388
    %390 = vmatprep.subr.mxu0 0.0
    %v391 = vand.u32 %v28, 4294901760
    %392 = vmatpush1.xpose.msra.mxu0 %v391
    %393 = vmatprep.subr.mxu0 0.0
    %v394 = vand.u32 %v27, 4294901760
    %395 = vmatpush1.xpose.msra.mxu0 %v394
    %396 = vmatprep.subr.mxu0 0.0
    %v397 = vand.u32 %v26, 4294901760
    %398 = vmatpush1.xpose.msra.mxu0 %v397
    %399 = vmatprep.subr.mxu0 0.0
    %v400 = vand.u32 %v25, 4294901760
    %401 = vmatpush1.xpose.msra.mxu0 %v400
    %402 = vmatprep.subr.mxu0 0.0
    %v403 = vand.u32 %v24, 4294901760
    %404 = vmatpush1.xpose.msra.mxu0 %v403
    %405 = vmatprep.subr.mxu0 0.0
    %v406 = vand.u32 %v23, 4294901760
    %407 = vmatpush1.xpose.msra.mxu0 %v406
    %408 = vmatprep.subr.mxu0 0.0
    %v409 = vand.u32 %v22, 4294901760
    %410 = vmatpush1.xpose.msra.mxu0 %v409
    %411 = vmatprep.subr.mxu0 0.0
    %v412 = vand.u32 %v21, 4294901760
    %413 = vmatpush1.xpose.msra.mxu0 %v412
    %414 = vmatprep.subr.mxu0 0.0
    %v415 = vand.u32 %v20, 4294901760
    %416 = vmatpush1.xpose.msra.mxu0 %v415
    %417 = vmatprep.subr.mxu0 0.0
    %v418 = vand.u32 %v19, 4294901760
    %419 = vmatpush1.xpose.msra.mxu0 %v418
    %420 = vmatprep.subr.mxu0 0.0
    %v421 = vand.u32 %v18, 4294901760
    %422 = vmatpush1.xpose.msra.mxu0 %v421
    %423 = vmatprep.subr.mxu0 0.0
    %v424 = vand.u32 %v17, 4294901760
    %425 = vmatpush1.xpose.msra.mxu0 %v424
    %426 = vmatprep.subr.mxu0 0.0
    %v427 = vand.u32 %v16, 4294901760
    %428 = vmatpush1.xpose.msra.mxu0 %v427
    %429 = vmatprep.subr.mxu0 0.0
    %v430 = vand.u32 %v15, 4294901760
    %431 = vmatpush1.xpose.msra.mxu0 %v430
    %432 = vmatprep.subr.mxu0 0.0
    %433 = vmatpush2.xpose.msra.mxu0 0.0
    %434 = vmatprep.subr.mxu0 0.0
    %435 = vmatpush2.xpose.msra.mxu0 0.0
    %436 = vmatprep.subr.mxu0 0.0
    %437 = vmatpush2.xpose.msra.mxu0 0.0
    %438 = vmatprep.subr.mxu0 0.0
    %439 = vmatpush2.xpose.msra.mxu0 0.0
    %440 = vmatprep.subr.mxu0 0.0
    %441 = vmatpush2.xpose.msra.mxu0 0.0
    %442 = vmatprep.subr.mxu0 0.0
    %443 = vmatpush2.xpose.msra.mxu0 0.0
    %444 = vmatprep.subr.mxu0 0.0
    %445 = vmatpush2.xpose.msra.mxu0 0.0
    %446 = vmatprep.subr.mxu0 0.0
    %447 = vmatpush2.xpose.msra.mxu0 0.0
    %448 = vmatprep.subr.mxu0 0.0
    %449 = vmatpush2.xpose.msra.mxu0 0.0
    %450 = vmatprep.subr.mxu0 0.0
    %451 = vmatpush2.xpose.msra.mxu0 0.0
    %452 = vmatprep.subr.mxu0 0.0
    %453 = vmatpush2.xpose.msra.mxu0 0.0
    %454 = vmatprep.subr.mxu0 0.0
    %455 = vmatpush2.xpose.msra.mxu0 0.0
    %456 = vmatprep.subr.mxu0 0.0
    %457 = vmatpush2.xpose.msra.mxu0 0.0
    %458 = vmatprep.subr.mxu0 0.0
    %459 = vmatpush2.xpose.msra.mxu0 0.0
    %460 = vmatprep.subr.mxu0 0.0
    %461 = vmatpush2.xpose.msra.mxu0 0.0
    %462 = vmatprep.subr.mxu0 0.0
    %463 = vmatpush2.xpose.msra.mxu0 0.0
    %464 = vmatprep.mubr.f32.mxu0 0.0
    %v465 = vand.u32 %v14, 4294901760
    %v466 = vsub.f32 %v14, %v465
    %v467 = vand.u32 %v466, 4294901760
    %468 = vmatmul.mubr.f32.gmra.mxu0 %v467
    %v469 = vpop.f32.mrf.mxu0
    %v470 = vadd.f32 %v381, %v469
    %v471 = vpop.f32.mrf.mxu0
    %472 = vdwg.mxu0
    %473 = vmatprep.subr.mxu0 0.0
    %v474 = vand.u32 %v30, 4294901760
    %v475 = vsub.f32 %v30, %v474
    %v476 = vand.u32 %v475, 4294901760
    %477 = vmatpush1.xpose.msra.mxu0 %v476
    %478 = vmatprep.subr.mxu0 0.0
    %v479 = vand.u32 %v29, 4294901760
    %v480 = vsub.f32 %v29, %v479
    %v481 = vand.u32 %v480, 4294901760
    %482 = vmatpush1.xpose.msra.mxu0 %v481
    %483 = vmatprep.subr.mxu0 0.0
    %v484 = vand.u32 %v28, 4294901760
    %v485 = vsub.f32 %v28, %v484
    %v486 = vand.u32 %v485, 4294901760
    %487 = vmatpush1.xpose.msra.mxu0 %v486
    %488 = vmatprep.subr.mxu0 0.0
    %v489 = vand.u32 %v27, 4294901760
    %v490 = vsub.f32 %v27, %v489
    %v491 = vand.u32 %v490, 4294901760
    %492 = vmatpush1.xpose.msra.mxu0 %v491
    %493 = vmatprep.subr.mxu0 0.0
    %v494 = vand.u32 %v26, 4294901760
    %v495 = vsub.f32 %v26, %v494
    %v496 = vand.u32 %v495, 4294901760
    %497 = vmatpush1.xpose.msra.mxu0 %v496
    %498 = vmatprep.subr.mxu0 0.0
    %v499 = vand.u32 %v25, 4294901760
    %v500 = vsub.f32 %v25, %v499
    %v501 = vand.u32 %v500, 4294901760
    %502 = vmatpush1.xpose.msra.mxu0 %v501
    %503 = vmatprep.subr.mxu0 0.0
    %v504 = vand.u32 %v24, 4294901760
    %v505 = vsub.f32 %v24, %v504
    %v506 = vand.u32 %v505, 4294901760
    %507 = vmatpush1.xpose.msra.mxu0 %v506
    %508 = vmatprep.subr.mxu0 0.0
    %v509 = vand.u32 %v23, 4294901760
    %v510 = vsub.f32 %v23, %v509
    %v511 = vand.u32 %v510, 4294901760
    %512 = vmatpush1.xpose.msra.mxu0 %v511
    %513 = vmatprep.subr.mxu0 0.0
    %v514 = vand.u32 %v22, 4294901760
    %v515 = vsub.f32 %v22, %v514
    %v516 = vand.u32 %v515, 4294901760
    %517 = vmatpush1.xpose.msra.mxu0 %v516
    %518 = vmatprep.subr.mxu0 0.0
    %v519 = vand.u32 %v21, 4294901760
    %v520 = vsub.f32 %v21, %v519
    %v521 = vand.u32 %v520, 4294901760
    %522 = vmatpush1.xpose.msra.mxu0 %v521
    %523 = vmatprep.subr.mxu0 0.0
    %v524 = vand.u32 %v20, 4294901760
    %v525 = vsub.f32 %v20, %v524
    %v526 = vand.u32 %v525, 4294901760
    %527 = vmatpush1.xpose.msra.mxu0 %v526
    %528 = vmatprep.subr.mxu0 0.0
    %v529 = vand.u32 %v19, 4294901760
    %v530 = vsub.f32 %v19, %v529
    %v531 = vand.u32 %v530, 4294901760
    %532 = vmatpush1.xpose.msra.mxu0 %v531
    %533 = vmatprep.subr.mxu0 0.0
    %v534 = vand.u32 %v18, 4294901760
    %v535 = vsub.f32 %v18, %v534
    %v536 = vand.u32 %v535, 4294901760
    %537 = vmatpush1.xpose.msra.mxu0 %v536
    %538 = vmatprep.subr.mxu0 0.0
    %v539 = vand.u32 %v17, 4294901760
    %v540 = vsub.f32 %v17, %v539
    %v541 = vand.u32 %v540, 4294901760
    %542 = vmatpush1.xpose.msra.mxu0 %v541
    %543 = vmatprep.subr.mxu0 0.0
    %v544 = vand.u32 %v16, 4294901760
    %v545 = vsub.f32 %v16, %v544
    %v546 = vand.u32 %v545, 4294901760
    %547 = vmatpush1.xpose.msra.mxu0 %v546
    %548 = vmatprep.subr.mxu0 0.0
    %v549 = vand.u32 %v15, 4294901760
    %v550 = vsub.f32 %v15, %v549
    %v551 = vand.u32 %v550, 4294901760
    %552 = vmatpush1.xpose.msra.mxu0 %v551
    %553 = vmatprep.subr.mxu0 0.0
    %554 = vmatpush2.xpose.msra.mxu0 0.0
    %555 = vmatprep.subr.mxu0 0.0
    %556 = vmatpush2.xpose.msra.mxu0 0.0
    %557 = vmatprep.subr.mxu0 0.0
    %558 = vmatpush2.xpose.msra.mxu0 0.0
    %559 = vmatprep.subr.mxu0 0.0
    %560 = vmatpush2.xpose.msra.mxu0 0.0
    %561 = vmatprep.subr.mxu0 0.0
    %562 = vmatpush2.xpose.msra.mxu0 0.0
    %563 = vmatprep.subr.mxu0 0.0
    %564 = vmatpush2.xpose.msra.mxu0 0.0
    %565 = vmatprep.subr.mxu0 0.0
    %566 = vmatpush2.xpose.msra.mxu0 0.0
    %567 = vmatprep.subr.mxu0 0.0
    %568 = vmatpush2.xpose.msra.mxu0 0.0
    %569 = vmatprep.subr.mxu0 0.0
    %570 = vmatpush2.xpose.msra.mxu0 0.0
    %571 = vmatprep.subr.mxu0 0.0
    %572 = vmatpush2.xpose.msra.mxu0 0.0
    %573 = vmatprep.subr.mxu0 0.0
    %574 = vmatpush2.xpose.msra.mxu0 0.0
    %575 = vmatprep.subr.mxu0 0.0
    %576 = vmatpush2.xpose.msra.mxu0 0.0
    %577 = vmatprep.subr.mxu0 0.0
    %578 = vmatpush2.xpose.msra.mxu0 0.0
    %579 = vmatprep.subr.mxu0 0.0
    %580 = vmatpush2.xpose.msra.mxu0 0.0
    %581 = vmatprep.subr.mxu0 0.0
    %582 = vmatpush2.xpose.msra.mxu0 0.0
    %583 = vmatprep.subr.mxu0 0.0
    %584 = vmatpush2.xpose.msra.mxu0 0.0
    %585 = vmatprep.mubr.f32.mxu0 0.0
    %v586 = vand.u32 %v14, 4294901760
    %587 = vmatmul.mubr.f32.gmra.mxu0 %v586
    %v588 = vpop.f32.mrf.mxu0
    %v589 = vadd.f32 %v470, %v588
    %v590 = vpop.f32.mrf.mxu0
    %591 = vdwg.mxu0
    %592 = vmatprep.subr.mxu0 0.0
    %v593 = vand.u32 %v30, 4294901760
    %594 = vmatpush1.xpose.msra.mxu0 %v593
    %595 = vmatprep.subr.mxu0 0.0
    %v596 = vand.u32 %v29, 4294901760
    %597 = vmatpush1.xpose.msra.mxu0 %v596
    %598 = vmatprep.subr.mxu0 0.0
    %v599 = vand.u32 %v28, 4294901760
    %600 = vmatpush1.xpose.msra.mxu0 %v599
    %601 = vmatprep.subr.mxu0 0.0
    %v602 = vand.u32 %v27, 4294901760
    %603 = vmatpush1.xpose.msra.mxu0 %v602
    %604 = vmatprep.subr.mxu0 0.0
    %v605 = vand.u32 %v26, 4294901760
    %606 = vmatpush1.xpose.msra.mxu0 %v605
    %607 = vmatprep.subr.mxu0 0.0
    %v608 = vand.u32 %v25, 4294901760
    %609 = vmatpush1.xpose.msra.mxu0 %v608
    %610 = vmatprep.subr.mxu0 0.0
    %v611 = vand.u32 %v24, 4294901760
    %612 = vmatpush1.xpose.msra.mxu0 %v611
    %613 = vmatprep.subr.mxu0 0.0
    %v614 = vand.u32 %v23, 4294901760
    %615 = vmatpush1.xpose.msra.mxu0 %v614
    %616 = vmatprep.subr.mxu0 0.0
    %v617 = vand.u32 %v22, 4294901760
    %618 = vmatpush1.xpose.msra.mxu0 %v617
    %619 = vmatprep.subr.mxu0 0.0
    %v620 = vand.u32 %v21, 4294901760
    %621 = vmatpush1.xpose.msra.mxu0 %v620
    %622 = vmatprep.subr.mxu0 0.0
    %v623 = vand.u32 %v20, 4294901760
    %624 = vmatpush1.xpose.msra.mxu0 %v623
    %625 = vmatprep.subr.mxu0 0.0
    %v626 = vand.u32 %v19, 4294901760
    %627 = vmatpush1.xpose.msra.mxu0 %v626
    %628 = vmatprep.subr.mxu0 0.0
    %v629 = vand.u32 %v18, 4294901760
    %630 = vmatpush1.xpose.msra.mxu0 %v629
    %631 = vmatprep.subr.mxu0 0.0
    %v632 = vand.u32 %v17, 4294901760
    %633 = vmatpush1.xpose.msra.mxu0 %v632
    %634 = vmatprep.subr.mxu0 0.0
    %v635 = vand.u32 %v16, 4294901760
    %636 = vmatpush1.xpose.msra.mxu0 %v635
    %637 = vmatprep.subr.mxu0 0.0
    %v638 = vand.u32 %v15, 4294901760
    %639 = vmatpush1.xpose.msra.mxu0 %v638
    %640 = vmatprep.subr.mxu0 0.0
    %641 = vmatpush2.xpose.msra.mxu0 0.0
    %642 = vmatprep.subr.mxu0 0.0
    %643 = vmatpush2.xpose.msra.mxu0 0.0
    %644 = vmatprep.subr.mxu0 0.0
    %645 = vmatpush2.xpose.msra.mxu0 0.0
    %646 = vmatprep.subr.mxu0 0.0
    %647 = vmatpush2.xpose.msra.mxu0 0.0
    %648 = vmatprep.subr.mxu0 0.0
    %649 = vmatpush2.xpose.msra.mxu0 0.0
    %650 = vmatprep.subr.mxu0 0.0
    %651 = vmatpush2.xpose.msra.mxu0 0.0
    %652 = vmatprep.subr.mxu0 0.0
    %653 = vmatpush2.xpose.msra.mxu0 0.0
    %654 = vmatprep.subr.mxu0 0.0
    %655 = vmatpush2.xpose.msra.mxu0 0.0
    %656 = vmatprep.subr.mxu0 0.0
    %657 = vmatpush2.xpose.msra.mxu0 0.0
    %658 = vmatprep.subr.mxu0 0.0
    %659 = vmatpush2.xpose.msra.mxu0 0.0
    %660 = vmatprep.subr.mxu0 0.0
    %661 = vmatpush2.xpose.msra.mxu0 0.0
    %662 = vmatprep.subr.mxu0 0.0
    %663 = vmatpush2.xpose.msra.mxu0 0.0
    %664 = vmatprep.subr.mxu0 0.0
    %665 = vmatpush2.xpose.msra.mxu0 0.0
    %666 = vmatprep.subr.mxu0 0.0
    %667 = vmatpush2.xpose.msra.mxu0 0.0
    %668 = vmatprep.subr.mxu0 0.0
    %669 = vmatpush2.xpose.msra.mxu0 0.0
    %670 = vmatprep.subr.mxu0 0.0
    %671 = vmatpush2.xpose.msra.mxu0 0.0
    %672 = vmatprep.mubr.f32.mxu0 0.0
    %v673 = vand.u32 %v14, 4294901760
    %674 = vmatmul.mubr.f32.gmra.mxu0 %v673
    %v675 = vpop.f32.mrf.mxu0
    %v676 = vadd.f32 %v589, %v675
    %v677 = vpop.f32.mrf.mxu0
    %678 = vdwg.mxu0
    %v679 = vand.u32 2147483647, %v676
    %vm680 = vcmp.le.f32.partialorder %v679, 0.7853982
    %vm681 = vcmp.lt.s32.totalorder %v676, 0
    %v682 = vand.u32 %v676, 2139095040
    %v683 = vshrl.u32 %v682, 23
    %v684 = vsub.s32 %v683, 127
    %v685 = vand.u32 2147483647, %v676
    %v686 = vand.u32 %v685, 8388607
    %v687 = vor.u32 %v686, 8388608
    %v688 = vsub.s32 0, %v687
    %v689 = vadd.s32 %v684, 1
    %vm690 = vcmp.gt.s32.totalorder %v689, 0
    %v691 = vsel %vm690, %v689, 0
    %v692 = vshrl.u32 %v691, 5
    %v693 = vand.u32 %v691, 31
    %v694 = vsub.s32 32, %v693
    %v695 = vshrl.u32 683565275, %v694
    %v696 = vshll.u32 683565275, %v693
    %v697 = vshrl.u32 2475754826, %v694
    %v698 = vor.u32 %v696, %v697
    %v699 = vshll.u32 2475754826, %v693
    %v700 = vshrl.u32 2131351028, %v694
    %v701 = vor.u32 %v699, %v700
    %v702 = vshll.u32 2131351028, %v693
    %v703 = vshrl.u32 2102212464, %v694
    %v704 = vor.u32 %v702, %v703
    %v705 = vshll.u32 2102212464, %v693
    %v706 = vshrl.u32 920167782, %v694
    %v707 = vor.u32 %v705, %v706
    %v708 = vshll.u32 920167782, %v693
    %v709 = vshrl.u32 1326507024, %v694
    %v710 = vor.u32 %v708, %v709
    %vm711 = vcmp.lt.s32.totalorder %v692, 1
    %vm712 = vcmp.lt.s32.totalorder %v692, 2
    %vm713 = vcmp.lt.s32.totalorder %v692, 3
    %vm714 = vcmp.lt.s32.totalorder %v692, 4
    %v715 = vsel %vm711, %v695, %v698
    %v716 = vsel %vm714, %v704, 2102212464
    %v717 = vsel %vm713, %v701, %v716
    %v718 = vsel %vm712, %v715, %v717
    %v719 = vsel %vm711, %v698, %v701
    %v720 = vsel %vm714, %v707, 920167782
    %v721 = vsel %vm713, %v704, %v720
    %v722 = vsel %vm712, %v719, %v721
    %v723 = vsel %vm711, %v701, %v704
    %v724 = vsel %vm714, %v710, 1326507024
    %v725 = vsel %vm713, %v707, %v724
    %v726 = vsel %vm712, %v723, %v725
    %v727 = vshll.u32 %v687, 8
    %v728 = vmul.u32.u64.compose %v727, %v726
    %v729 = vextract.low.u32 %v728
    %v730 = vextract.high.u32 %v728
    %v731 = vmul.u32.u64.compose %v727, %v722
    %v732 = vextract.low.u32 %v731
    %v733 = vextract.high.u32 %v731
    %v734 = vmul.u32 %v727, %v718
    %v735 = vadd.s32 %v730, %v732
    %vm736 = vc.u32 %v730, %v732
    %v737 = vadd.s32 %v733, 1
    %v738 = vsel %vm736, %v737, %v733
    %v739 = vadd.s32 %v734, %v738
    %v740 = vadd.s32 %v739, 536870912
    %v741 = vshrl.u32 %v740, 30
    %v742 = vshll.u32 %v741, 30
    %v743 = vsub.s32 %v739, %v742
    %vm744 = vcmp.lt.s32.totalorder %v743, 0
    %v745 = vsub.s32 0, %v743
    %v746 = vsel %vm744, %v745, %v743
    %v747 = vclz %v746
    %v748 = vsub.s32 %v747, 2
    %vm749 = vcmp.gt.s32.totalorder 0, %v748
    %v750 = vsel %vm749, 0, %v748
    %v751 = vsub.s32 32, %v750
    %v752 = vshll.u32 %v743, %v750
    %v753 = vshrl.u32 %v735, %v751
    %v754 = vor.u32 %v752, %v753
    %v755 = vsub.s32 4294967266, %v750
    %v756 = vadd.s32 %v755, 127
    %v757 = vshll.u32 %v756, 23
    %v758 = vor.u32 4788187, %v757
    %v759 = vand.u32 2147483647, %v758
    %v761 = vcvt.s32.f32 %v754
    %v762 = vmul.f32 %v761, %v759
    %v763 = vxor.u32 %v762, 2147483648
    %v764 = vsel %vm681, %v763, %v762
    %v765 = vsub.s32 4, %v741
    %v766 = vsel %vm681, %v765, %v741
    %v767 = vsel %vm680, %v676, %v764
    %v768 = vsel %vm680, 0, %v766
    %v769 = vcosq.f32.pop %v767
    %v770 = vsinq.f32.pop %v767
    %vm771 = vweird.f32 %v676
    %v772 = vadd.s32 %v768, 3
    %v773 = vand.u32 %v772, 3
    %vm774 = vcmp.lt.s32.totalorder %v773, 2
    %vm775 = vcmp.eq.s32.totalorder %v773, 0
    %v776 = vxor.u32 %v770, 2147483648
    %v777 = vsel %vm775, %v769, %v776
    %vm778 = vcmp.eq.s32.totalorder %v773, 2
    %v779 = vxor.u32 %v769, 2147483648
    %v780 = vsel %vm778, %v779, %v770
    %v781 = vsel %vm774, %v777, %v780
    %v782 = vsel %vm771, nan, %v781
    %783 = vst [vmem:[#allocation2] sm:$0xff] %v782
    // Predicated region
    $region14: #{siren_mlp.1} parent=1 // pred_check
      _
    $region15: #{siren_mlp.1} parent=1 // pred_check_branch
      %785 = sbr.rel (0) target = $region17
    $region16: #{siren_mlp.1} parent=1 // pred_region
      // Predicated region
      $region18: #{siren_mlp.1} parent=16 // pred_check
        _
      $region19: #{siren_mlp.1} parent=16 // pred_check_branch
        %787 = sbr.rel (0) target = $region21
      $region20: #{siren_mlp.1} parent=16 // pred_region
        // Predicated region
        $region22: #{siren_mlp.1} parent=20 // pred_check
          _
        $region23: #{siren_mlp.1} parent=20 // pred_check_branch
          %789 = sbr.rel target = $region25
        $region24: #{siren_mlp.1} parent=20 // pred_region
          // Predicated region
          $region37: #{siren_mlp.1} parent=24 // pred_check
            _
          $region38: #{siren_mlp.1} parent=24 // pred_check_branch
            %805 = sbr.rel (0) target = $region40
          $region39: #{siren_mlp.1} parent=24 // pred_region
            %s807 = ssub.s32 16, 1
            loop: start=0, step=1, limit=1
            $region41: #{siren_mlp.1} parent=39 // loop_pre_header
              _
            $region42: #{siren_mlp.1} parent=39 // loop_header
              %s809 = sphi 0, %s813
              %p810 = scmp.ge.s32.totalorder %s809, 1
              %s814 = sphi [#allocation2], [#allocation2]
              %s815 = sphi %s3, %s3
            $region43: #{siren_mlp.1} parent=39 // loop_header_branch
              %812 = sbr.rel (%p810) target = $region47
            $region44: #{siren_mlp.1} parent=39 // loop_body
              %v816 = vld [vmem:[%s814] sm:%s807]
              %817 = vst [vmem:[%s815] sm:%s807] %v816
            $region45: #{siren_mlp.1} parent=39 // loop_footer
              %s813 = sadd.s32 1, %s809
            $region46: #{siren_mlp.1} parent=39 // loop_footer_branch
              %808 = sbr.rel target = $region42
            $region47: #{siren_mlp.1} parent=39 // loop_exit
              _
          $region40: #{siren_mlp.1} parent=24 // pred_fallthru
            _
        $region25: #{siren_mlp.1} parent=20 // pred_fallthru
          _
        // Predicated region
        $region26: #{siren_mlp.1} parent=20 // pred_check
          _
        $region27: #{siren_mlp.1} parent=20 // pred_check_branch
          %791 = sbr.rel (0) target = $region29
        $region28: #{siren_mlp.1} parent=20 // pred_region
          %s793 = ssub.s32 16, 1
          loop: start=0, step=1, limit=1
          $region30: #{siren_mlp.1} parent=28 // loop_pre_header
            _
          $region31: #{siren_mlp.1} parent=28 // loop_header
            %s795 = sphi 0, %s799
            %p796 = scmp.ge.s32.totalorder %s795, 1
            %s800 = sphi [#allocation2], [#allocation2]
            %s801 = sphi %s3, %s3
          $region32: #{siren_mlp.1} parent=28 // loop_header_branch
            %798 = sbr.rel (%p796) target = $region36
          $region33: #{siren_mlp.1} parent=28 // loop_body
            %v802 = vld [vmem:[%s800] sm:%s793]
            %803 = vst [vmem:[%s801] sm:%s793] %v802
          $region34: #{siren_mlp.1} parent=28 // loop_footer
            %s799 = sadd.s32 1, %s795
          $region35: #{siren_mlp.1} parent=28 // loop_footer_branch
            %794 = sbr.rel target = $region31
          $region36: #{siren_mlp.1} parent=28 // loop_exit
            _
        $region29: #{siren_mlp.1} parent=20 // pred_fallthru
          _
      $region21: #{siren_mlp.1} parent=16 // pred_fallthru
        _
      %818 = vnop
    $region17: #{siren_mlp.1} parent=1 // pred_fallthru
      _
    // Predicated region
    $region48: #{siren_mlp.1} parent=1 // pred_check
      _
    $region49: #{siren_mlp.1} parent=1 // pred_check_branch
      %820 = sbr.rel (0) target = $region51
    $region50: #{siren_mlp.1} parent=1 // pred_region
      _
    $region51: #{siren_mlp.1} parent=1 // pred_fallthru
      _

</llo_original>
